<compile_context>
chip_gen: v6e
topology: v6e:2x2x1
jax: 0.10.0
libtpu: 0.0.40
codegen_flags: <defaults>
</compile_context>

<pallas_src>
import functools
import jax
import jax.numpy as jnp
from jax.experimental import pallas as pl
from jax.experimental.pallas import tpu as pltpu

# ----- module-level constants of the reference file (DWTA_BHGT.py) -----
NUM_WEAPONS = 3
NUM_TARGETS = 5
SEQ = NUM_WEAPONS * NUM_TARGETS + 1      # 16 (n_nodes)
EMBEDDING_DIM = 32
BN_EPS = 1e-5

_LANES = 128
_TM_PACKED_MAX = 4096                        # streaming tile: 4096*128*4B = 2 MiB/block
_RESIDENT_MAX_SLAB_BYTES = 4 * 1024 * 1024   # resident path cap per packed slab
_VMEM_LIMIT_BYTES = 32 * 1024 * 1024         # explicit budget, safe on v5e/v6e/v7x


def _round_up(a, m):
    return (a + m - 1) // m * m


def _fold_channels(v, pack, f):
    """Reduce the `pack` adjacent f-lane blocks of a (1, L) vector.

    Input lanes hold per-lane-block partial per-channel sums; output lanes hold
    the per-channel totals, replicated in every block (directly usable against
    the lane-packed data).  log2(pack) XLU roll+add steps on an 8-sublane
    value; runs once per kernel, off the VPU critical path.
    """
    if pack == 1:
        return v
    l = v.shape[-1]
    v8 = jnp.broadcast_to(v, (8, l))
    shift = (pack // 2) * f
    while shift >= f:
        v8 = v8 + pltpu.roll(v8, shift=shift, axis=1)
        shift //= 2
    return v8[0:1, :]


# ------------------------- resident single-pass kernel -----------------------
def _resident_kernel(x1_ref, x2_ref, g_ref, b_ref, o_ref, *,
                     inv_count, pack, f, n_pad):
    """One grid step: fused add + training-mode BatchNorm; inputs read once."""
    x = x1_ref[...].astype(jnp.float32) + x2_ref[...].astype(jnp.float32)
    # Per-channel mean (replicated across the `pack` lane blocks).
    s = _fold_channels(jnp.sum(x, axis=0, keepdims=True), pack, f)
    mean = s * inv_count
    # Centered variance (numerically safer than E[x^2]-mean^2).  The n_pad
    # zero-padded rows each contribute mean^2; subtracted exactly below.
    d = x - mean
    q = _fold_channels(jnp.sum(d * d, axis=0, keepdims=True), pack, f)
    var = (q - float(n_pad) * mean * mean) * inv_count
    inv = jax.lax.rsqrt(var + BN_EPS)
    scale = g_ref[...] * inv
    shift = b_ref[...] - mean * scale
    o_ref[...] = (x * scale + shift).astype(o_ref.dtype)


# --------------------------- streaming two-phase kernel ----------------------
def _streaming_kernel(x1_ref, x2_ref, g_ref, b_ref, o_ref, s_ref, q_ref, *,
                      inv_count, pack, f):
    """grid=(2, T): phase 0 accumulates statistics, phase 1 normalizes/writes.

    s_ref / q_ref: (1, L) VMEM scratch; hold (sum, sum_sq) during phase 0 and
    are reused to hold (scale, shift) for phase 1 after the finalize step.
    """
    phase = pl.program_id(0)
    i = pl.program_id(1)
    last = pl.num_programs(1) - 1

    x = x1_ref[...].astype(jnp.float32) + x2_ref[...].astype(jnp.float32)

    @pl.when((phase == 0) & (i == 0))
    def _init():
        s_ref[...] = jnp.zeros_like(s_ref)
        q_ref[...] = jnp.zeros_like(q_ref)

    @pl.when(phase == 0)
    def _accumulate():
        # Lowers to vreg adds + a single cross-sublane reduce per tile; the
        # kernel is HBM-bandwidth bound so this stays off the critical path.
        s_ref[...] += jnp.sum(x, axis=0, keepdims=True)
        q_ref[...] += jnp.sum(x * x, axis=0, keepdims=True)

    @pl.when((phase == 0) & (i == last))
    def _finalize():
        s = _fold_channels(s_ref[...], pack, f)
        q = _fold_channels(q_ref[...], pack, f)
        mean = s * inv_count
        # sum/sumsq streaming form (biased, training-mode BN); exact under
        # zero padding, adequate for roughly-centered activations.
        var = q * inv_count - mean * mean
        inv = jax.lax.rsqrt(var + BN_EPS)
        scale = g_ref[...] * inv
        s_ref[...] = scale                        # reuse scratch: scale
        q_ref[...] = b_ref[...] - mean * scale    # reuse scratch: shift

    @pl.when(phase == 1)
    def _normalize():
        o_ref[...] = (x * s_ref[...] + q_ref[...]).astype(o_ref.dtype)


# ----------------------------------- wrapper ---------------------------------
def _pick_streaming_tile(mp, cap):
    """Largest multiple of 8 that divides mp (a multiple of 8) and is <= cap."""
    best = 8
    d = 8
    stop = min(mp, cap)
    while d <= stop:
        if mp % d == 0:
            best = d
        d += 8
    return best


def instance_normalization_forward(x1, x2, gamma, beta, *,
                                   force_streaming=False, tile_rows_packed=None):
    """Forward of InstnaceNormalization: BatchNorm1d(F)(x1 + x2), training stats.

    x1, x2: (b, p, n, F); gamma/beta: (F,) affine parameters.
    """
    b, p, n, f = x1.shape
    M = b * p * n
    out_dtype = x1.dtype

    # Lane packing: pack `pack` consecutive rows of the f-wide channel dim into
    # one 128-lane row so vregs / DMAs / stores are lane-dense.
    pack = _LANES // f if (f < _LANES and _LANES % f == 0) else 1
    L = pack * f

    # Pad M (zero rows) so the packed row count is a multiple of 8.  Zero rows
    # are exact for the statistics (they add 0 to the sums, which are divided
    # by the true M) and the padded outputs are dropped.  For this module's
    # shapes (M = b*p*16, f = 32) the pad is empty, so no extra HBM slab copies.
    m2 = _round_up(M, pack * 8)
    n_pad = m2 - M
    x1_2d = x1.reshape(M, f)
    x2_2d = x2.reshape(M, f)
    if n_pad:
        x1_2d = jnp.pad(x1_2d, ((0, n_pad), (0, 0)))
        x2_2d = jnp.pad(x2_2d, ((0, n_pad), (0, 0)))
    mp = m2 // pack
    x1_p = x1_2d.reshape(mp, L)
    x2_p = x2_2d.reshape(mp, L)

    # Tiny (1, L) affine params, pre-tiled to the packed lane layout.
    g = jnp.tile(gamma.reshape(1, f).astype(jnp.float32), (1, pack))
    bt = jnp.tile(beta.reshape(1, f).astype(jnp.float32), (1, pack))

    inv_count = 1.0 / float(M)
    slab_bytes = mp * L * 4
    resident = ((not force_streaming) and tile_rows_packed is None
                and slab_bytes <= _RESIDENT_MAX_SLAB_BYTES)

    if resident:
        kernel = functools.partial(_resident_kernel, inv_count=inv_count,
                                   pack=pack, f=f, n_pad=n_pad)
        out = pl.pallas_call(
            kernel,
            out_shape=jax.ShapeDtypeStruct((mp, L), out_dtype),
            grid=(1,),
            in_specs=[
                pl.BlockSpec((mp, L), lambda i: (0, 0)),
                pl.BlockSpec((mp, L), lambda i: (0, 0)),
                pl.BlockSpec((1, L), lambda i: (0, 0)),
                pl.BlockSpec((1, L), lambda i: (0, 0)),
            ],
            out_specs=pl.BlockSpec((mp, L), lambda i: (0, 0)),
            compiler_params=pltpu.CompilerParams(
                dimension_semantics=("arbitrary",),
                vmem_limit_bytes=_VMEM_LIMIT_BYTES),
        )(x1_p, x2_p, g, bt)
    else:
        if tile_rows_packed is None:
            tm = _pick_streaming_tile(mp, _TM_PACKED_MAX)
        else:
            tm = tile_rows_packed
            assert tm % 8 == 0 and mp % tm == 0, \
                "tile_rows_packed must be a multiple of 8 dividing the packed row count"
        t = mp // tm
        kernel = functools.partial(_streaming_kernel, inv_count=inv_count,
                                   pack=pack, f=f)
        out = pl.pallas_call(
            kernel,
            out_shape=jax.ShapeDtypeStruct((mp, L), out_dtype),
            grid=(2, t),
            in_specs=[
                pl.BlockSpec((tm, L), lambda phase, i: (i, 0)),
                pl.BlockSpec((tm, L), lambda phase, i: (i, 0)),
                pl.BlockSpec((1, L), lambda phase, i: (0, 0)),
                pl.BlockSpec((1, L), lambda phase, i: (0, 0)),
            ],
            # i * phase: the output block index stays 0 through the statistics
            # phase (no garbage write-back ever reaches HBM); each block is
            # written exactly once, during phase 1.
            out_specs=pl.BlockSpec((tm, L), lambda phase, i: (i * phase, 0)),
            scratch_shapes=[
                pltpu.VMEM((1, L), jnp.float32),   # sum   -> scale
                pltpu.VMEM((1, L), jnp.float32),   # sumsq -> shift
            ],
            compiler_params=pltpu.CompilerParams(
                dimension_semantics=("arbitrary", "arbitrary"),
                vmem_limit_bytes=_VMEM_LIMIT_BYTES),
        )(x1_p, x2_p, g, bt)

    y = out.reshape(m2, f)
    if n_pad:
        y = y[:M]
    return y.reshape(b, p, n, f)


# ------------------------------ reference (pure JAX) --------------------------
def reference_forward(x1, x2, gamma, beta):
    x = (x1 + x2).astype(jnp.float32)
    b, p, n, f = x.shape
    y = x.reshape(b * p * n, f)
    mu = y.mean(0, keepdims=True)
    var = ((y - mu) ** 2).mean(0, keepdims=True)        # biased, training-mode BN
    yn = (y - mu) / jnp.sqrt(var + BN_EPS) * gamma.reshape(1, f) + beta.reshape(1, f)
    return yn.reshape(b, p, n, f)


# --------------------------------- main ---------------------------------------
if __name__ == "__main__":
    key = jax.random.PRNGKey(0)
    k1, k2, k3, k4 = jax.random.split(key, 4)

    batch, par, seq = 2, 2, SEQ                     # (2, 2, 16, 32)
    x1 = jax.random.normal(k1, (batch, par, seq, EMBEDDING_DIM), jnp.float32)
    x2 = jax.random.normal(k2, (batch, par, seq, EMBEDDING_DIM), jnp.float32)
    gamma = 1.0 + 0.1 * jax.random.normal(k3, (EMBEDDING_DIM,), jnp.float32)
    beta = 0.1 * jax.random.normal(k4, (EMBEDDING_DIM,), jnp.float32)

    ref = reference_forward(x1, x2, gamma, beta)

    # Resident single-pass path (packed slab = 8 KiB): one grid step, lane-dense
    # 128-wide blocks, inputs read from HBM exactly once.
    out = jax.block_until_ready(instance_normalization_forward(x1, x2, gamma, beta))
    assert out.shape == (batch, par, seq, EMBEDDING_DIM)
    assert jnp.allclose(out, ref, rtol=1e-4, atol=1e-4), "resident path mismatch vs reference"

    # Streaming two-phase path (forced, tiny tiles) to exercise the large-M
    # accumulate/finalize pipeline used when the slab exceeds the VMEM budget.
    out_s = jax.block_until_ready(
        instance_normalization_forward(x1, x2, gamma, beta,
                                       force_streaming=True, tile_rows_packed=8))
    assert jnp.allclose(out_s, ref, rtol=1e-4, atol=1e-4), "streaming path mismatch vs reference"

    print("KERNEL_OK")
</pallas_src>

<mosaic_0001>
module attributes {stable_mosaic.version = 11 : i64} {
  func.func @_resident_kernel(%arg0: i32, %arg1: memref<16x128xf32, #tpu.memory_space<vmem>>, %arg2: memref<16x128xf32, #tpu.memory_space<vmem>>, %arg3: memref<1x128xf32, #tpu.memory_space<vmem>>, %arg4: memref<1x128xf32, #tpu.memory_space<vmem>>, %arg5: memref<16x128xf32, #tpu.memory_space<vmem>>) attributes {dimension_semantics = [#tpu.dimension_semantics<arbitrary>], iteration_bounds = array<i64: 1>, scalar_prefetch = 0 : i64, scratch_operands = 0 : i64, tpu.core_type = #tpu.core_type<tc>, window_params = [{pipeline_mode = #tpu.pipeline_mode<synchronous>, transform_indices = @transform_0, window_bounds = array<i64: 16, 128>}, {pipeline_mode = #tpu.pipeline_mode<synchronous>, transform_indices = @transform_1, window_bounds = array<i64: 16, 128>}, {pipeline_mode = #tpu.pipeline_mode<synchronous>, transform_indices = @transform_2, window_bounds = array<i64: 1, 128>}, {pipeline_mode = #tpu.pipeline_mode<synchronous>, transform_indices = @transform_3, window_bounds = array<i64: 1, 128>}, {pipeline_mode = #tpu.pipeline_mode<synchronous>, transform_indices = @transform_4, window_bounds = array<i64: 16, 128>}]} {
    %c0 = arith.constant 0 : index
    %c0_0 = arith.constant 0 : index
    %0 = vector.load %arg1[%c0, %c0_0] : memref<16x128xf32, #tpu.memory_space<vmem>>, vector<16x128xf32>
    %c0_1 = arith.constant 0 : index
    %c0_2 = arith.constant 0 : index
    %1 = vector.load %arg2[%c0_1, %c0_2] : memref<16x128xf32, #tpu.memory_space<vmem>>, vector<16x128xf32>
    %2 = arith.addf %0, %1 : vector<16x128xf32>
    %cst = arith.constant dense<0.000000e+00> : vector<128xf32>
    %3 = vector.multi_reduction <add>, %2, %cst [0] : vector<16x128xf32> to vector<128xf32>
    %4 = vector.shape_cast %3 : vector<128xf32> to vector<1x128xf32>
    %5 = vector.shape_cast %4 : vector<1x128xf32> to vector<1x128xf32>
    %6 = vector.broadcast %5 : vector<1x128xf32> to vector<8x128xf32>
    %c64_i32 = arith.constant 64 : i32
    %7 = tpu.dynamic_rotate %6 by %c64_i32 dim 1 : vector<8x128xf32>, i32 -> vector<8x128xf32>
    %8 = arith.addf %6, %7 : vector<8x128xf32>
    %c32_i32 = arith.constant 32 : i32
    %9 = tpu.dynamic_rotate %8 by %c32_i32 dim 1 : vector<8x128xf32>, i32 -> vector<8x128xf32>
    %10 = arith.addf %8, %9 : vector<8x128xf32>
    %11 = vector.extract_strided_slice %10 {offsets = [0, 0], sizes = [1, 128], strides = [1, 1]} : vector<8x128xf32> to vector<1x128xf32>
    %cst_3 = arith.constant 1.562500e-02 : f32
    %12 = vector.broadcast %cst_3 : f32 to vector<1x128xf32>
    %13 = arith.mulf %11, %12 : vector<1x128xf32>
    %14 = vector.broadcast %13 : vector<1x128xf32> to vector<16x128xf32>
    %15 = arith.subf %2, %14 : vector<16x128xf32>
    %16 = arith.mulf %15, %15 : vector<16x128xf32>
    %cst_4 = arith.constant dense<0.000000e+00> : vector<128xf32>
    %17 = vector.multi_reduction <add>, %16, %cst_4 [0] : vector<16x128xf32> to vector<128xf32>
    %18 = vector.shape_cast %17 : vector<128xf32> to vector<1x128xf32>
    %19 = vector.shape_cast %18 : vector<1x128xf32> to vector<1x128xf32>
    %20 = vector.broadcast %19 : vector<1x128xf32> to vector<8x128xf32>
    %c64_i32_5 = arith.constant 64 : i32
    %21 = tpu.dynamic_rotate %20 by %c64_i32_5 dim 1 : vector<8x128xf32>, i32 -> vector<8x128xf32>
    %22 = arith.addf %20, %21 : vector<8x128xf32>
    %c32_i32_6 = arith.constant 32 : i32
    %23 = tpu.dynamic_rotate %22 by %c32_i32_6 dim 1 : vector<8x128xf32>, i32 -> vector<8x128xf32>
    %24 = arith.addf %22, %23 : vector<8x128xf32>
    %25 = vector.extract_strided_slice %24 {offsets = [0, 0], sizes = [1, 128], strides = [1, 1]} : vector<8x128xf32> to vector<1x128xf32>
    %cst_7 = arith.constant 0.000000e+00 : f32
    %26 = vector.broadcast %cst_7 : f32 to vector<1x128xf32>
    %27 = arith.mulf %26, %13 : vector<1x128xf32>
    %28 = arith.mulf %27, %13 : vector<1x128xf32>
    %29 = arith.subf %25, %28 : vector<1x128xf32>
    %cst_8 = arith.constant 1.562500e-02 : f32
    %30 = vector.broadcast %cst_8 : f32 to vector<1x128xf32>
    %31 = arith.mulf %29, %30 : vector<1x128xf32>
    %cst_9 = arith.constant 9.99999974E-6 : f32
    %32 = vector.broadcast %cst_9 : f32 to vector<1x128xf32>
    %33 = arith.addf %31, %32 : vector<1x128xf32>
    %34 = math.rsqrt %33 : vector<1x128xf32>
    %c0_10 = arith.constant 0 : index
    %c0_11 = arith.constant 0 : index
    %35 = vector.load %arg3[%c0_10, %c0_11] : memref<1x128xf32, #tpu.memory_space<vmem>>, vector<1x128xf32>
    %36 = arith.mulf %35, %34 : vector<1x128xf32>
    %c0_12 = arith.constant 0 : index
    %c0_13 = arith.constant 0 : index
    %37 = vector.load %arg4[%c0_12, %c0_13] : memref<1x128xf32, #tpu.memory_space<vmem>>, vector<1x128xf32>
    %38 = arith.mulf %13, %36 : vector<1x128xf32>
    %39 = arith.subf %37, %38 : vector<1x128xf32>
    %40 = vector.broadcast %36 : vector<1x128xf32> to vector<16x128xf32>
    %41 = arith.mulf %2, %40 : vector<16x128xf32>
    %42 = vector.broadcast %39 : vector<1x128xf32> to vector<16x128xf32>
    %43 = arith.addf %41, %42 : vector<16x128xf32>
    %c0_14 = arith.constant 0 : index
    %c0_15 = arith.constant 0 : index
    %44 = vector.load %arg5[%c0_14, %c0_15] : memref<16x128xf32, #tpu.memory_space<vmem>>, vector<16x128xf32>
    tpu.vector_store %arg5[%c0_14, %c0_15], %43 {strides = array<i32>} : memref<16x128xf32, #tpu.memory_space<vmem>>, vector<16x128xf32>,
    return
  }
  func.func @transform_0(%arg0: i32) -> (i32, i32) {
    %c0_i32 = arith.constant 0 : i32
    %c0_i32_0 = arith.constant 0 : i32
    %c0_i32_1 = arith.constant 0 : i32
    return %c0_i32, %c0_i32_0 : i32, i32
  }
  func.func @transform_1(%arg0: i32) -> (i32, i32) {
    %c0_i32 = arith.constant 0 : i32
    %c0_i32_0 = arith.constant 0 : i32
    %c0_i32_1 = arith.constant 0 : i32
    return %c0_i32, %c0_i32_0 : i32, i32
  }
  func.func @transform_2(%arg0: i32) -> (i32, i32) {
    %c0_i32 = arith.constant 0 : i32
    %c0_i32_0 = arith.constant 0 : i32
    %c0_i32_1 = arith.constant 0 : i32
    return %c0_i32, %c0_i32_0 : i32, i32
  }
  func.func @transform_3(%arg0: i32) -> (i32, i32) {
    %c0_i32 = arith.constant 0 : i32
    %c0_i32_0 = arith.constant 0 : i32
    %c0_i32_1 = arith.constant 0 : i32
    return %c0_i32, %c0_i32_0 : i32, i32
  }
  func.func @transform_4(%arg0: i32) -> (i32, i32) {
    %c0_i32 = arith.constant 0 : i32
    %c0_i32_0 = arith.constant 0 : i32
    %c0_i32_1 = arith.constant 0 : i32
    return %c0_i32, %c0_i32_0 : i32, i32
  }
}

</mosaic_0001>

<llo_original>
// kernel: tpu_custom_call.1
$region0: #{tpu_custom_call.1}
  #allocation0 [shape = 'u32[]', space=smem, size = 0x4, offset = 0x4, fixed_abs, tag = 'smem constant byte address 0x4 - core index']
  #allocation1 [shape = 'u32[144,128]{1,0:T(1,128)}', space=vmem, size = 0x12000, scoped, tag = 'internal scratch']
  %s0 = inlined_call_operand.hbm [shape: f32[16,128], index: 0, kind: input, shape index: {}]
  %s1 = inlined_call_operand.hbm [shape: f32[16,128], index: 1, kind: input, shape index: {}]
  %s2 = inlined_call_operand.vmem [shape: f32[1,128], index: 2, kind: input, shape index: {}]
  %s3 = inlined_call_operand.vmem [shape: f32[1,128], index: 3, kind: input, shape index: {}]
  %s4 = inlined_call_operand.hbm [shape: f32[16,128], index: 4, kind: output, shape index: {}]
  %s5 = sld [smem:[#allocation0]]
  $region34: #{tpu_custom_call.1} parent=0
    _
  %s7 = ssub.s32 1, %s5
  %s8 = scalar_select 0, %s7, %s5
  $region1: #{tpu_custom_call.1} parent=0
    #allocation2 [shape = 'u8[8192]{0}', space=vmem, size = 0x2000, scoped, tag = 'input window, operand 0, single buffered']
    #allocation3 [shape = 's32[1]{0}', space=sflag, size = 0x4, scoped, tag = 'scoped memory for tpu_custom_call.1']
    #allocation4 [shape = 's32[1]{0}', space=sflag, size = 0x4, scoped, tag = 'scoped memory for tpu_custom_call.1']
    #allocation5 [shape = 'u8[8192]{0}', space=vmem, size = 0x2000, scoped, tag = 'input window, operand 1, single buffered']
    #allocation6 [shape = 's32[1]{0}', space=sflag, size = 0x4, scoped, tag = 'scoped memory for tpu_custom_call.1']
    #allocation7 [shape = 'u8[8192]{0}', space=vmem, size = 0x2000, scoped, tag = 'output window, operand 0, single buffered']
    %9 = vsyncpa [#allocation3], 0
    %10 = vsyncpa [#allocation6], 0
    %11 = vsyncpa [#allocation4], 0
    // Predicated region
    $region2: #{tpu_custom_call.1} parent=1 // pred_check
      _
    $region3: #{tpu_custom_call.1} parent=1 // pred_check_branch
      %13 = sbr.rel (0) target = $region5
    $region4: #{tpu_custom_call.1} parent=1 // pred_region
      %s15 = ssub.s32 256, 256
      %16 = vsyncadd [#allocation3], %s15
      %s17 = sshll.u32 [#allocation2], 4
      %s18 = int_to_ptr.vmem [resolvable:$true] %s17
      %23 = dma.hbm_to_vmem [thread:$0]  %s0, 256, %s18, [#allocation3], 128, 128, 8
    $region5: #{tpu_custom_call.1} parent=1 // pred_fallthru
      _
    // Predicated region
    $region6: #{tpu_custom_call.1} parent=1 // pred_check
      _
    $region7: #{tpu_custom_call.1} parent=1 // pred_check_branch
      %25 = sbr.rel (0) target = $region9
    $region8: #{tpu_custom_call.1} parent=1 // pred_region
      %s27 = ssub.s32 256, 256
      %28 = vsyncadd [#allocation6], %s27
      %s29 = sshll.u32 [#allocation5], 4
      %s30 = int_to_ptr.vmem [resolvable:$true] %s29
      %35 = dma.hbm_to_vmem [thread:$0]  %s1, 256, %s30, [#allocation6], 128, 128, 8
    $region9: #{tpu_custom_call.1} parent=1 // pred_fallthru
      _
    // Predicated region
    $region10: #{tpu_custom_call.1} parent=1 // pred_check
      _
    $region11: #{tpu_custom_call.1} parent=1 // pred_check_branch
      %37 = sbr.rel (0) target = $region13
    $region12: #{tpu_custom_call.1} parent=1 // pred_region
      _
    $region13: #{tpu_custom_call.1} parent=1 // pred_fallthru
      _
    // Predicated region
    $region14: #{tpu_custom_call.1} parent=1 // pred_check
      _
    $region15: #{tpu_custom_call.1} parent=1 // pred_check_branch
      %39 = sbr.rel (0) target = $region17
    $region16: #{tpu_custom_call.1} parent=1 // pred_region
      _
    $region17: #{tpu_custom_call.1} parent=1 // pred_fallthru
      _
    // Predicated region
    $region18: #{tpu_custom_call.1} parent=1 // pred_check
      _
    $region19: #{tpu_custom_call.1} parent=1 // pred_check_branch
      %41 = sbr.rel (0) target = $region21
    $region20: #{tpu_custom_call.1} parent=1 // pred_region
      %42 = dma.done [#allocation3], 256
    $region21: #{tpu_custom_call.1} parent=1 // pred_fallthru
      _
    // Predicated region
    $region22: #{tpu_custom_call.1} parent=1 // pred_check
      _
    $region23: #{tpu_custom_call.1} parent=1 // pred_check_branch
      %44 = sbr.rel (0) target = $region25
    $region24: #{tpu_custom_call.1} parent=1 // pred_region
      %45 = dma.done [#allocation6], 256
    $region25: #{tpu_custom_call.1} parent=1 // pred_fallthru
      _
    %v46 = vld [vmem:[#allocation2] sm:$0xff]
    %v47 = vld [vmem:[#allocation2 + $0x8] sm:$0xff]
    %v48 = vld [vmem:[#allocation5] sm:$0xff]
    %v49 = vld [vmem:[#allocation5 + $0x8] sm:$0xff]
    %v50 = vadd.f32 %v46, %v48
    %v51 = vadd.f32 %v47, %v49
    %v52 = vadd.f32 %v50, %v51
    %v53 = vrot.slane %v52, 4
    %v54 = vadd.f32 %v52, %v53
    %v55 = vrot.slane %v54, 2
    %v56 = vadd.f32 %v54, %v55
    %v57 = vrot.slane %v56, 1
    %v58 = vadd.f32 %v56, %v57
    %59 = vrot.lane.b32.xlu0 %v58, 64
    %v60 = vpop.permute.xlu0 %59
    %v61 = vadd.f32 %v58, %v60
    %62 = vrot.lane.b32.xlu0 %v61, 32
    %v63 = vpop.permute.xlu0 %62
    %v64 = vadd.f32 %v61, %v63
    %v65 = vmul.f32 %v64, 0.015625
    %v66 = vlaneseq
    %v67 = vshrl.u32 %v66, 7
    %v68 = vsub.s32 0, %v67
    %v69 = vrot.slane %v65, %v68
    %v70 = vsub.f32 %v50, %v69
    %v71 = vsub.f32 %v51, %v69
    %v72 = vmul.f32 %v70, %v70
    %v73 = vmul.f32 %v71, %v71
    %v74 = vadd.f32 %v72, %v73
    %v75 = vrot.slane %v74, 4
    %v76 = vadd.f32 %v74, %v75
    %v77 = vrot.slane %v76, 2
    %v78 = vadd.f32 %v76, %v77
    %v79 = vrot.slane %v78, 1
    %v80 = vadd.f32 %v78, %v79
    %81 = vrot.lane.b32.xlu0 %v80, 64
    %v82 = vpop.permute.xlu0 %81
    %v83 = vadd.f32 %v80, %v82
    %84 = vrot.lane.b32.xlu0 %v83, 32
    %v85 = vpop.permute.xlu0 %84
    %v86 = vadd.f32 %v83, %v85
    %v87 = vmul.f32 %v65, 0.0
    %v88 = vmul.f32 %v87, %v65
    %v89 = vsub.f32 %v86, %v88
    %v90 = vmul.f32 %v89, 0.015625
    %v91 = vadd.f32 %v90, 1e-05
    %v92 = vrsqrt.pop %v91
    %v93 = vld [vmem:[%s2] sm:$0x1]
    %v94 = vmul.f32 %v93, %v92
    %v95 = vld [vmem:[%s3] sm:$0x1]
    %v96 = vmul.f32 %v65, %v94
    %v97 = vsub.f32 %v95, %v96
    %v99 = vlaneseq
    %v100 = vshrl.u32 %v99, 7
    %v101 = vsub.s32 0, %v100
    %v102 = vrot.slane %v94, %v101
    %v104 = vmul.f32 %v50, %v102
    %v105 = vmul.f32 %v51, %v102
    %v107 = vlaneseq
    %v108 = vshrl.u32 %v107, 7
    %v109 = vsub.s32 0, %v108
    %v110 = vrot.slane %v97, %v109
    %v112 = vadd.f32 %v104, %v110
    %v113 = vadd.f32 %v105, %v110
    %114 = vst [vmem:[#allocation7] sm:$0xff] %v112
    %115 = vst [vmem:[#allocation7 + $0x8] sm:$0xff] %v113
    // Predicated region
    $region26: #{tpu_custom_call.1} parent=1 // pred_check
      _
    $region27: #{tpu_custom_call.1} parent=1 // pred_check_branch
      %117 = sbr.rel (0) target = $region29
    $region28: #{tpu_custom_call.1} parent=1 // pred_region
      %s119 = ssub.s32 256, 256
      %120 = vsyncadd [#allocation4], %s119
      %s121 = sshll.u32 [#allocation7], 4
      %s122 = int_to_ptr.vmem [resolvable:$true] %s121
      %127 = dma.vmem_to_hbm [thread:$0]  %s122, 256, %s4, [#allocation4], 128, 128, 8
    $region29: #{tpu_custom_call.1} parent=1 // pred_fallthru
      _
    // Predicated region
    $region30: #{tpu_custom_call.1} parent=1 // pred_check
      _
    $region31: #{tpu_custom_call.1} parent=1 // pred_check_branch
      %129 = sbr.rel (0) target = $region33
    $region32: #{tpu_custom_call.1} parent=1 // pred_region
      %130 = dma.done [#allocation4], 256
    $region33: #{tpu_custom_call.1} parent=1 // pred_fallthru
      _
    %131 = vsyncpa [#allocation3], 1
    %132 = vsyncpa [#allocation6], 1
    %133 = vsyncpa [#allocation4], 1

</llo_original>
